<compile_context>
chip_gen: v7x
topology: tpu7x:2x2x1
jax: 0.10.0
libtpu: 0.0.40
codegen_flags: <defaults>
</compile_context>

<pallas_src>
import functools

import jax
import jax.numpy as jnp
from jax.experimental import pallas as pl
from jax.experimental.pallas import tpu as pltpu


def _round_up(n, m):
    return ((n + m - 1) // m) * m


def _linear_kernel(x_ref, wt_ref, b_ref, o_ref):
    # x_ref:  (TB, 512)   input dtype (cast to f32 here == x.to(torch.float32))
    # wt_ref: (512, Cp)   float32, W transposed and zero-padded to Cp lanes
    # b_ref:  (1, Cp)     float32, zero-padded bias
    # o_ref:  (TB, Cp)    float32
    x = x_ref[...].astype(jnp.float32)
    acc = jnp.dot(x, wt_ref[...], preferred_element_type=jnp.float32)
    o_ref[...] = acc + b_ref[...]


def prepare_params(weight, bias, *, lane=128):
    """One-time parameter prep (module init): transpose, cast, pad C -> Cp.

    weight: (C, 512), bias: (C,). Returns (wt_pad (512, Cp) f32,
    b_pad (1, Cp) f32, n_classes).
    """
    C, D = weight.shape
    Cp = _round_up(C, lane)
    wt_pad = jnp.zeros((D, Cp), jnp.float32).at[:, :C].set(
        weight.T.astype(jnp.float32))
    b_pad = jnp.zeros((1, Cp), jnp.float32).at[:, :C].set(
        bias.astype(jnp.float32))
    return wt_pad, b_pad, C


@functools.partial(jax.jit, static_argnames=("n_classes", "batch_tile"))
def tiny_model_forward(x, wt_pad, b_pad, *, n_classes, batch_tile=512):
    """x: (B, 512) any float dtype. Returns (B, n_classes) float32."""
    B, D = x.shape
    Cp = wt_pad.shape[1]

    # Batch tile: full batch for small B, otherwise a VMEM-friendly tile that
    # also fits v7x's smaller (64 MiB) VMEM with double-buffering.
    TB = B if B <= batch_tile else batch_tile
    grid = (pl.cdiv(B, TB),)

    cost = pl.CostEstimate(
        flops=2 * B * D * Cp,
        transcendentals=0,
        bytes_accessed=(B * D * x.dtype.itemsize
                        + D * Cp * 4 + Cp * 4 + B * Cp * 4),
    )

    out_pad = pl.pallas_call(
        _linear_kernel,
        out_shape=jax.ShapeDtypeStruct((B, Cp), jnp.float32),
        grid=grid,
        in_specs=[
            pl.BlockSpec((TB, D), lambda i: (i, 0)),   # x: tiled over batch
            pl.BlockSpec((D, Cp), lambda i: (0, 0)),   # weight: resident
            pl.BlockSpec((1, Cp), lambda i: (0, 0)),   # bias: resident
        ],
        out_specs=pl.BlockSpec((TB, Cp), lambda i: (i, 0)),
        compiler_params=pltpu.CompilerParams(
            dimension_semantics=("parallel",)),
        cost_estimate=cost,
    )(x, wt_pad, b_pad)

    # Padded lanes hold exact zeros from the padded weight/bias; slice them off.
    return out_pad[:, :n_classes]


if __name__ == "__main__":
    key = jax.random.PRNGKey(0)
    k_x, k_w, k_b = jax.random.split(key, 3)

    n_classes = 10
    batch = 8
    in_features = 512

    # Deterministic synthetic parameters (mimicking nn.Linear init shapes).
    bound = 1.0 / (in_features ** 0.5)
    weight = jax.random.uniform(k_w, (n_classes, in_features),
                                minval=-bound, maxval=bound, dtype=jnp.float32)
    bias = jax.random.uniform(k_b, (n_classes,),
                              minval=-bound, maxval=bound, dtype=jnp.float32)

    x = jax.random.normal(k_x, (batch, in_features), dtype=jnp.float32)

    # One-time parameter prep (hoisted out of the per-call path).
    wt_pad, b_pad, C = prepare_params(weight, bias)

    out = tiny_model_forward(x, wt_pad, b_pad, n_classes=C)
    out = jax.block_until_ready(out)

    # Cross-check against plain JAX reference (x.to(float32) @ W^T + b).
    ref = x.astype(jnp.float32) @ weight.T + bias
    assert out.shape == (batch, n_classes)
    assert jnp.allclose(out, ref, atol=1e-5, rtol=1e-5)

    print("KERNEL_OK")
</pallas_src>

<mosaic_0001>
module attributes {stable_mosaic.version = 11 : i64} {
  func.func @_linear_kernel(%arg0: i32, %arg1: memref<8x512xf32, #tpu.memory_space<vmem>>, %arg2: memref<512x128xf32, #tpu.memory_space<vmem>>, %arg3: memref<1x128xf32, #tpu.memory_space<vmem>>, %arg4: memref<8x128xf32, #tpu.memory_space<vmem>>) attributes {dimension_semantics = [#tpu.dimension_semantics<parallel>], iteration_bounds = array<i64: 1>, scalar_prefetch = 0 : i64, scratch_operands = 0 : i64, tpu.core_type = #tpu.core_type<tc>, window_params = [{transform_indices = @transform_0, window_bounds = array<i64: 8, 512>}, {pipeline_mode = #tpu.pipeline_mode<synchronous>, transform_indices = @transform_1, window_bounds = array<i64: 512, 128>}, {pipeline_mode = #tpu.pipeline_mode<synchronous>, transform_indices = @transform_2, window_bounds = array<i64: 1, 128>}, {transform_indices = @transform_3, window_bounds = array<i64: 8, 128>}]} {
    %c0 = arith.constant 0 : index
    %c0_0 = arith.constant 0 : index
    %0 = vector.load %arg1[%c0, %c0_0] : memref<8x512xf32, #tpu.memory_space<vmem>>, vector<8x512xf32>
    %c0_1 = arith.constant 0 : index
    %c0_2 = arith.constant 0 : index
    %1 = vector.load %arg2[%c0_1, %c0_2] : memref<512x128xf32, #tpu.memory_space<vmem>>, vector<512x128xf32>
    %cst = arith.constant dense<0.000000e+00> : vector<8x128xf32>
    %2 = tpu.matmul %0, %1, %cst {dimension_numbers = #tpu.dot_dimension_numbers<[1], [0], [0], [1], [0, 0, 1, 1], [], []>} : vector<8x512xf32>, vector<512x128xf32>, vector<8x128xf32> -> vector<8x128xf32>
    %c0_3 = arith.constant 0 : index
    %c0_4 = arith.constant 0 : index
    %3 = vector.load %arg3[%c0_3, %c0_4] : memref<1x128xf32, #tpu.memory_space<vmem>>, vector<1x128xf32>
    %4 = vector.broadcast %3 : vector<1x128xf32> to vector<8x128xf32>
    %5 = arith.addf %2, %4 : vector<8x128xf32>
    %c0_5 = arith.constant 0 : index
    %c0_6 = arith.constant 0 : index
    %6 = vector.load %arg4[%c0_5, %c0_6] : memref<8x128xf32, #tpu.memory_space<vmem>>, vector<8x128xf32>
    tpu.vector_store %arg4[%c0_5, %c0_6], %5 {strides = array<i32>} : memref<8x128xf32, #tpu.memory_space<vmem>>, vector<8x128xf32>,
    return
  }
  func.func @transform_0(%arg0: i32) -> (i32, i32) {
    %c0_i32 = arith.constant 0 : i32
    %c0_i32_0 = arith.constant 0 : i32
    return %arg0, %c0_i32 : i32, i32
  }
  func.func @transform_1(%arg0: i32) -> (i32, i32) {
    %c0_i32 = arith.constant 0 : i32
    %c0_i32_0 = arith.constant 0 : i32
    %c0_i32_1 = arith.constant 0 : i32
    return %c0_i32, %c0_i32_0 : i32, i32
  }
  func.func @transform_2(%arg0: i32) -> (i32, i32) {
    %c0_i32 = arith.constant 0 : i32
    %c0_i32_0 = arith.constant 0 : i32
    %c0_i32_1 = arith.constant 0 : i32
    return %c0_i32, %c0_i32_0 : i32, i32
  }
  func.func @transform_3(%arg0: i32) -> (i32, i32) {
    %c0_i32 = arith.constant 0 : i32
    %c0_i32_0 = arith.constant 0 : i32
    return %arg0, %c0_i32 : i32, i32
  }
}

</mosaic_0001>

<llo_original>
// kernel: tiny_model_forward.1
$region0: #{tiny_model_forward.1}
  #allocation0 [shape = 'u32[]', space=smem, size = 0x4, offset = 0x4, fixed_abs, tag = 'smem constant byte address 0x4 - core index']
  #allocation1 [shape = 'u32[144,128]{1,0:T(1,128)}', space=vmem, size = 0x12000, scoped, tag = 'internal scratch']
  %s0 = inlined_call_operand.hbm [shape: f32[8,512], index: 0, kind: input, shape index: {}]
  %s1 = inlined_call_operand.hbm [shape: f32[512,128], index: 1, kind: input, shape index: {}]
  %s2 = inlined_call_operand.vmem [shape: f32[1,128], index: 2, kind: input, shape index: {}]
  %s3 = inlined_call_operand.hbm [shape: f32[8,128], index: 3, kind: output, shape index: {}]
  %s4 = sld [smem:[#allocation0]]
  $region30: #{tiny_model_forward.1} parent=0
    _
  %s6 = ssub.s32 1, %s4
  %s7 = scalar_select 0, %s6, %s4
  $region1: #{tiny_model_forward.1} parent=0
    #allocation2 [shape = 'u8[16384]{0}', space=vmem, size = 0x4000, scoped, tag = 'input window, operand 0, single buffered']
    #allocation3 [shape = 's32[1]{0}', space=sflag, size = 0x4, scoped, tag = 'scoped memory for tiny_model_forward.1']
    #allocation4 [shape = 's32[1]{0}', space=sflag, size = 0x4, scoped, tag = 'scoped memory for tiny_model_forward.1']
    #allocation5 [shape = 'u8[262144]{0}', space=vmem, size = 0x40000, scoped, tag = 'input window, operand 1, single buffered']
    #allocation6 [shape = 's32[1]{0}', space=sflag, size = 0x4, scoped, tag = 'scoped memory for tiny_model_forward.1']
    #allocation7 [shape = 'u8[4096]{0}', space=vmem, size = 0x1000, scoped, tag = 'output window, operand 0, single buffered']
    %8 = vsyncpa [#allocation3], 0
    %9 = vsyncpa [#allocation6], 0
    %10 = vsyncpa [#allocation4], 0
    // Predicated region
    $region2: #{tiny_model_forward.1} parent=1 // pred_check
      _
    $region3: #{tiny_model_forward.1} parent=1 // pred_check_branch
      %12 = sbr.rel (0) target = $region5
    $region4: #{tiny_model_forward.1} parent=1 // pred_region
      %s14 = ssub.s32 512, 512
      %15 = vsyncadd [#allocation3], %s14
      %s17 = sshll.u32 [#allocation2], 4
      %s18 = int_to_ptr.vmem [resolvable:$true] %s17
      %20 = dma.hbm_to_vmem [thread:$0]  %s0, 512, %s18, [#allocation3]
    $region5: #{tiny_model_forward.1} parent=1 // pred_fallthru
      _
    // Predicated region
    $region6: #{tiny_model_forward.1} parent=1 // pred_check
      _
    $region7: #{tiny_model_forward.1} parent=1 // pred_check_branch
      %22 = sbr.rel (0) target = $region9
    $region8: #{tiny_model_forward.1} parent=1 // pred_region
      %s24 = ssub.s32 8192, 8192
      %25 = vsyncadd [#allocation6], %s24
      %s26 = sshll.u32 [#allocation5], 4
      %s27 = int_to_ptr.vmem [resolvable:$true] %s26
      %32 = dma.hbm_to_vmem [thread:$0]  %s1, 8192, %s27, [#allocation6], 128, 128, 8
    $region9: #{tiny_model_forward.1} parent=1 // pred_fallthru
      _
    // Predicated region
    $region10: #{tiny_model_forward.1} parent=1 // pred_check
      _
    $region11: #{tiny_model_forward.1} parent=1 // pred_check_branch
      %34 = sbr.rel (0) target = $region13
    $region12: #{tiny_model_forward.1} parent=1 // pred_region
      _
    $region13: #{tiny_model_forward.1} parent=1 // pred_fallthru
      _
    // Predicated region
    $region14: #{tiny_model_forward.1} parent=1 // pred_check
      _
    $region15: #{tiny_model_forward.1} parent=1 // pred_check_branch
      %36 = sbr.rel (0) target = $region17
    $region16: #{tiny_model_forward.1} parent=1 // pred_region
      %37 = dma.done [#allocation3], 512
    $region17: #{tiny_model_forward.1} parent=1 // pred_fallthru
      _
    // Predicated region
    $region18: #{tiny_model_forward.1} parent=1 // pred_check
      _
    $region19: #{tiny_model_forward.1} parent=1 // pred_check_branch
      %39 = sbr.rel (0) target = $region21
    $region20: #{tiny_model_forward.1} parent=1 // pred_region
      %40 = dma.done [#allocation6], 8192
    $region21: #{tiny_model_forward.1} parent=1 // pred_fallthru
      _
    %v41 = vld [vmem:[#allocation2] sm:$0xff]
    %v42 = vld [vmem:[#allocation2 + $0x8] sm:$0xff]
    %v43 = vld [vmem:[#allocation2 + $0x10] sm:$0xff]
    %v44 = vld [vmem:[#allocation2 + $0x18] sm:$0xff]
    %v45 = vld [vmem:[#allocation5] sm:$0xff]
    %v46 = vld [vmem:[#allocation5 + $0x8] sm:$0xff]
    %v47 = vld [vmem:[#allocation5 + $0x10] sm:$0xff]
    %v48 = vld [vmem:[#allocation5 + $0x18] sm:$0xff]
    %v49 = vld [vmem:[#allocation5 + $0x20] sm:$0xff]
    %v50 = vld [vmem:[#allocation5 + $0x28] sm:$0xff]
    %v51 = vld [vmem:[#allocation5 + $0x30] sm:$0xff]
    %v52 = vld [vmem:[#allocation5 + $0x38] sm:$0xff]
    %v53 = vld [vmem:[#allocation5 + $0x40] sm:$0xff]
    %v54 = vld [vmem:[#allocation5 + $0x48] sm:$0xff]
    %v55 = vld [vmem:[#allocation5 + $0x50] sm:$0xff]
    %v56 = vld [vmem:[#allocation5 + $0x58] sm:$0xff]
    %v57 = vld [vmem:[#allocation5 + $0x60] sm:$0xff]
    %v58 = vld [vmem:[#allocation5 + $0x68] sm:$0xff]
    %v59 = vld [vmem:[#allocation5 + $0x70] sm:$0xff]
    %v60 = vld [vmem:[#allocation5 + $0x78] sm:$0xff]
    %v61 = vld [vmem:[#allocation5 + $0x80] sm:$0xff]
    %v62 = vld [vmem:[#allocation5 + $0x88] sm:$0xff]
    %v63 = vld [vmem:[#allocation5 + $0x90] sm:$0xff]
    %v64 = vld [vmem:[#allocation5 + $0x98] sm:$0xff]
    %v65 = vld [vmem:[#allocation5 + $0xa0] sm:$0xff]
    %v66 = vld [vmem:[#allocation5 + $0xa8] sm:$0xff]
    %v67 = vld [vmem:[#allocation5 + $0xb0] sm:$0xff]
    %v68 = vld [vmem:[#allocation5 + $0xb8] sm:$0xff]
    %v69 = vld [vmem:[#allocation5 + $0xc0] sm:$0xff]
    %v70 = vld [vmem:[#allocation5 + $0xc8] sm:$0xff]
    %v71 = vld [vmem:[#allocation5 + $0xd0] sm:$0xff]
    %v72 = vld [vmem:[#allocation5 + $0xd8] sm:$0xff]
    %v73 = vld [vmem:[#allocation5 + $0xe0] sm:$0xff]
    %v74 = vld [vmem:[#allocation5 + $0xe8] sm:$0xff]
    %v75 = vld [vmem:[#allocation5 + $0xf0] sm:$0xff]
    %v76 = vld [vmem:[#allocation5 + $0xf8] sm:$0xff]
    %v77 = vld [vmem:[#allocation5 + $0x100] sm:$0xff]
    %v78 = vld [vmem:[#allocation5 + $0x108] sm:$0xff]
    %v79 = vld [vmem:[#allocation5 + $0x110] sm:$0xff]
    %v80 = vld [vmem:[#allocation5 + $0x118] sm:$0xff]
    %v81 = vld [vmem:[#allocation5 + $0x120] sm:$0xff]
    %v82 = vld [vmem:[#allocation5 + $0x128] sm:$0xff]
    %v83 = vld [vmem:[#allocation5 + $0x130] sm:$0xff]
    %v84 = vld [vmem:[#allocation5 + $0x138] sm:$0xff]
    %v85 = vld [vmem:[#allocation5 + $0x140] sm:$0xff]
    %v86 = vld [vmem:[#allocation5 + $0x148] sm:$0xff]
    %v87 = vld [vmem:[#allocation5 + $0x150] sm:$0xff]
    %v88 = vld [vmem:[#allocation5 + $0x158] sm:$0xff]
    %v89 = vld [vmem:[#allocation5 + $0x160] sm:$0xff]
    %v90 = vld [vmem:[#allocation5 + $0x168] sm:$0xff]
    %v91 = vld [vmem:[#allocation5 + $0x170] sm:$0xff]
    %v92 = vld [vmem:[#allocation5 + $0x178] sm:$0xff]
    %v93 = vld [vmem:[#allocation5 + $0x180] sm:$0xff]
    %v94 = vld [vmem:[#allocation5 + $0x188] sm:$0xff]
    %v95 = vld [vmem:[#allocation5 + $0x190] sm:$0xff]
    %v96 = vld [vmem:[#allocation5 + $0x198] sm:$0xff]
    %v97 = vld [vmem:[#allocation5 + $0x1a0] sm:$0xff]
    %v98 = vld [vmem:[#allocation5 + $0x1a8] sm:$0xff]
    %v99 = vld [vmem:[#allocation5 + $0x1b0] sm:$0xff]
    %v100 = vld [vmem:[#allocation5 + $0x1b8] sm:$0xff]
    %v101 = vld [vmem:[#allocation5 + $0x1c0] sm:$0xff]
    %v102 = vld [vmem:[#allocation5 + $0x1c8] sm:$0xff]
    %v103 = vld [vmem:[#allocation5 + $0x1d0] sm:$0xff]
    %v104 = vld [vmem:[#allocation5 + $0x1d8] sm:$0xff]
    %v105 = vld [vmem:[#allocation5 + $0x1e0] sm:$0xff]
    %v106 = vld [vmem:[#allocation5 + $0x1e8] sm:$0xff]
    %v107 = vld [vmem:[#allocation5 + $0x1f0] sm:$0xff]
    %v108 = vld [vmem:[#allocation5 + $0x1f8] sm:$0xff]
    %v109 = vld [vmem:[%s2] sm:$0x1]
    %v111 = vlaneseq
    %v112 = vshrl.u32 %v111, 7
    %v113 = vsub.s32 0, %v112
    %v114 = vrot.slane %v109, %v113
    %116 = vmatprep.subr.mxu0 0.0
    %117 = vmatpush1.msra.mxu0 %v45
    %118 = vmatprep.subr.mxu0 0.0
    %119 = vmatpush1.msra.mxu0 %v46
    %120 = vmatprep.subr.mxu0 0.0
    %121 = vmatpush1.msra.mxu0 %v47
    %122 = vmatprep.subr.mxu0 0.0
    %123 = vmatpush1.msra.mxu0 %v48
    %124 = vmatprep.subr.mxu0 0.0
    %125 = vmatpush1.msra.mxu0 %v49
    %126 = vmatprep.subr.mxu0 0.0
    %127 = vmatpush1.msra.mxu0 %v50
    %128 = vmatprep.subr.mxu0 0.0
    %129 = vmatpush1.msra.mxu0 %v51
    %130 = vmatprep.subr.mxu0 0.0
    %131 = vmatpush1.msra.mxu0 %v52
    %132 = vmatprep.subr.mxu0 0.0
    %133 = vmatpush1.msra.mxu0 %v53
    %134 = vmatprep.subr.mxu0 0.0
    %135 = vmatpush1.msra.mxu0 %v54
    %136 = vmatprep.subr.mxu0 0.0
    %137 = vmatpush1.msra.mxu0 %v55
    %138 = vmatprep.subr.mxu0 0.0
    %139 = vmatpush1.msra.mxu0 %v56
    %140 = vmatprep.subr.mxu0 0.0
    %141 = vmatpush1.msra.mxu0 %v57
    %142 = vmatprep.subr.mxu0 0.0
    %143 = vmatpush1.msra.mxu0 %v58
    %144 = vmatprep.subr.mxu0 0.0
    %145 = vmatpush1.msra.mxu0 %v59
    %146 = vmatprep.subr.mxu0 0.0
    %147 = vmatpush1.msra.mxu0 %v60
    %148 = vmatprep.subr.mxu0 0.0
    %149 = vmatpush1.msra.mxu0 %v61
    %150 = vmatprep.subr.mxu0 0.0
    %151 = vmatpush1.msra.mxu0 %v62
    %152 = vmatprep.subr.mxu0 0.0
    %153 = vmatpush1.msra.mxu0 %v63
    %154 = vmatprep.subr.mxu0 0.0
    %155 = vmatpush1.msra.mxu0 %v64
    %156 = vmatprep.subr.mxu0 0.0
    %157 = vmatpush1.msra.mxu0 %v65
    %158 = vmatprep.subr.mxu0 0.0
    %159 = vmatpush1.msra.mxu0 %v66
    %160 = vmatprep.subr.mxu0 0.0
    %161 = vmatpush1.msra.mxu0 %v67
    %162 = vmatprep.subr.mxu0 0.0
    %163 = vmatpush1.msra.mxu0 %v68
    %164 = vmatprep.subr.mxu0 0.0
    %165 = vmatpush1.msra.mxu0 %v69
    %166 = vmatprep.subr.mxu0 0.0
    %167 = vmatpush1.msra.mxu0 %v70
    %168 = vmatprep.subr.mxu0 0.0
    %169 = vmatpush1.msra.mxu0 %v71
    %170 = vmatprep.subr.mxu0 0.0
    %171 = vmatpush1.msra.mxu0 %v72
    %172 = vmatprep.subr.mxu0 0.0
    %173 = vmatpush1.msra.mxu0 %v73
    %174 = vmatprep.subr.mxu0 0.0
    %175 = vmatpush1.msra.mxu0 %v74
    %176 = vmatprep.subr.mxu0 0.0
    %177 = vmatpush1.msra.mxu0 %v75
    %178 = vmatprep.subr.mxu0 0.0
    %179 = vmatpush1.msra.mxu0 %v76
    %180 = vmatprep.mubr.f32.mxu0 %v42
    %181 = vmatmul.mubr.f32.gmra.mrb[0].mxu0 %v41
    %v182 = vpop.f32.mrb[0].mxu0
    %v183 = vadd.f32 %v114, %v182
    %v184 = vpop.f32.mrb[0].mxu0
    %185 = vdwg.mxu0
    %186 = vmatprep.subr.mxu0 0.0
    %187 = vmatpush1.msra.mxu0 %v77
    %188 = vmatprep.subr.mxu0 0.0
    %189 = vmatpush1.msra.mxu0 %v78
    %190 = vmatprep.subr.mxu0 0.0
    %191 = vmatpush1.msra.mxu0 %v79
    %192 = vmatprep.subr.mxu0 0.0
    %193 = vmatpush1.msra.mxu0 %v80
    %194 = vmatprep.subr.mxu0 0.0
    %195 = vmatpush1.msra.mxu0 %v81
    %196 = vmatprep.subr.mxu0 0.0
    %197 = vmatpush1.msra.mxu0 %v82
    %198 = vmatprep.subr.mxu0 0.0
    %199 = vmatpush1.msra.mxu0 %v83
    %200 = vmatprep.subr.mxu0 0.0
    %201 = vmatpush1.msra.mxu0 %v84
    %202 = vmatprep.subr.mxu0 0.0
    %203 = vmatpush1.msra.mxu0 %v85
    %204 = vmatprep.subr.mxu0 0.0
    %205 = vmatpush1.msra.mxu0 %v86
    %206 = vmatprep.subr.mxu0 0.0
    %207 = vmatpush1.msra.mxu0 %v87
    %208 = vmatprep.subr.mxu0 0.0
    %209 = vmatpush1.msra.mxu0 %v88
    %210 = vmatprep.subr.mxu0 0.0
    %211 = vmatpush1.msra.mxu0 %v89
    %212 = vmatprep.subr.mxu0 0.0
    %213 = vmatpush1.msra.mxu0 %v90
    %214 = vmatprep.subr.mxu0 0.0
    %215 = vmatpush1.msra.mxu0 %v91
    %216 = vmatprep.subr.mxu0 0.0
    %217 = vmatpush1.msra.mxu0 %v92
    %218 = vmatprep.subr.mxu0 0.0
    %219 = vmatpush1.msra.mxu0 %v93
    %220 = vmatprep.subr.mxu0 0.0
    %221 = vmatpush1.msra.mxu0 %v94
    %222 = vmatprep.subr.mxu0 0.0
    %223 = vmatpush1.msra.mxu0 %v95
    %224 = vmatprep.subr.mxu0 0.0
    %225 = vmatpush1.msra.mxu0 %v96
    %226 = vmatprep.subr.mxu0 0.0
    %227 = vmatpush1.msra.mxu0 %v97
    %228 = vmatprep.subr.mxu0 0.0
    %229 = vmatpush1.msra.mxu0 %v98
    %230 = vmatprep.subr.mxu0 0.0
    %231 = vmatpush1.msra.mxu0 %v99
    %232 = vmatprep.subr.mxu0 0.0
    %233 = vmatpush1.msra.mxu0 %v100
    %234 = vmatprep.subr.mxu0 0.0
    %235 = vmatpush1.msra.mxu0 %v101
    %236 = vmatprep.subr.mxu0 0.0
    %237 = vmatpush1.msra.mxu0 %v102
    %238 = vmatprep.subr.mxu0 0.0
    %239 = vmatpush1.msra.mxu0 %v103
    %240 = vmatprep.subr.mxu0 0.0
    %241 = vmatpush1.msra.mxu0 %v104
    %242 = vmatprep.subr.mxu0 0.0
    %243 = vmatpush1.msra.mxu0 %v105
    %244 = vmatprep.subr.mxu0 0.0
    %245 = vmatpush1.msra.mxu0 %v106
    %246 = vmatprep.subr.mxu0 0.0
    %247 = vmatpush1.msra.mxu0 %v107
    %248 = vmatprep.subr.mxu0 0.0
    %249 = vmatpush1.msra.mxu0 %v108
    %250 = vmatprep.mubr.f32.mxu0 %v44
    %251 = vmatmul.mubr.f32.gmra.mrb[0].mxu0 %v43
    %v252 = vpop.f32.mrb[0].mxu0
    %v253 = vadd.f32 %v183, %v252
    %v254 = vpop.f32.mrb[0].mxu0
    %255 = vdwg.mxu0
    %256 = vst [vmem:[#allocation7] sm:$0xff] %v253
    // Predicated region
    $region22: #{tiny_model_forward.1} parent=1 // pred_check
      _
    $region23: #{tiny_model_forward.1} parent=1 // pred_check_branch
      %258 = sbr.rel (0) target = $region25
    $region24: #{tiny_model_forward.1} parent=1 // pred_region
      %s260 = ssub.s32 128, 128
      %261 = vsyncadd [#allocation4], %s260
      %s263 = sshll.u32 [#allocation7], 4
      %s264 = int_to_ptr.vmem [resolvable:$true] %s263
      %266 = dma.vmem_to_hbm [thread:$0]  %s264, 128, %s3, [#allocation4]
    $region25: #{tiny_model_forward.1} parent=1 // pred_fallthru
      _
    // Predicated region
    $region26: #{tiny_model_forward.1} parent=1 // pred_check
      _
    $region27: #{tiny_model_forward.1} parent=1 // pred_check_branch
      %268 = sbr.rel (0) target = $region29
    $region28: #{tiny_model_forward.1} parent=1 // pred_region
      %269 = dma.done [#allocation4], 128
    $region29: #{tiny_model_forward.1} parent=1 // pred_fallthru
      _
    %270 = vsyncpa [#allocation3], 1
    %271 = vsyncpa [#allocation6], 1
    %272 = vsyncpa [#allocation4], 1

</llo_original>
